<compile_context>
chip_gen: v5e
topology: v5e:2x2
jax: 0.10.0
libtpu: 0.0.40
codegen_flags: <defaults>
</compile_context>

<pallas_src>
import jax
import jax.numpy as jnp
from jax.experimental import pallas as pl
from jax.experimental.pallas import tpu as pltpu

LANE = 128


def _add_one_kernel(x_ref, o_ref):
    # Elementwise hot path: x + 1 (dtype-preserving).
    o_ref[...] = x_ref[...] + jnp.asarray(1, dtype=x_ref.dtype)


def _best_cols(m):
    """Widest multiple-of-128 divisor of m (capped at 8192), or 0 if none."""
    for cand in (8192, 4096, 2048, 1024, 512, 256, 128):
        if m % cand == 0:
            return cand
    return 0


def _tiled_add_one_2d(x2d, *, donate_input=False):
    """x2d: (rows, cols) with cols a multiple of 128. Returns x2d + 1."""
    rows, cols = x2d.shape
    dtype = x2d.dtype
    itemsize = jnp.dtype(dtype).itemsize
    # Packed sublane multiple: 8 (32-bit), 16 (bf16/fp16), 32 (int8/fp8).
    sublane = max(8, 32 // itemsize)
    n = rows * cols

    # ~2 MiB per block => 4 live buffers (in+out, double-buffered) ~= 8 MiB
    # per core.  Safe on v5e (16 MiB scoped default) and on v7x with both
    # TensorCores holding their own working set.
    max_block_bytes = 2 * 1024 * 1024
    tile_rows = max(sublane, min(rows, max_block_bytes // (cols * itemsize)))
    tile_rows = max(sublane, (tile_rows // sublane) * sublane)

    if rows <= tile_rows:
        tile_rows = rows  # single full-dim block (always legal)
    elif rows % tile_rows != 0:
        # Avoid a masked edge tile: snap to a divisor of rows (still a
        # multiple of sublane) within ~25% of the target size, if one exists.
        lo = max(sublane, int(tile_rows * 0.75))
        for cand in range(tile_rows, lo - 1, -sublane):
            if rows % cand == 0:
                tile_rows = cand
                break

    grid = (pl.cdiv(rows, tile_rows),)

    extra = {}
    if donate_input:
        extra["input_output_aliases"] = {0: 0}

    return pl.pallas_call(
        _add_one_kernel,
        out_shape=jax.ShapeDtypeStruct((rows, cols), dtype),
        grid=grid,
        in_specs=[pl.BlockSpec((tile_rows, cols), lambda i: (i, 0))],
        out_specs=pl.BlockSpec((tile_rows, cols), lambda i: (i, 0)),
        compiler_params=pltpu.CompilerParams(
            dimension_semantics=("parallel",),   # shard row tiles across TCs (v7x)
            vmem_limit_bytes=32 * 1024 * 1024,   # plenty for the 8 MiB working set
        ),
        cost_estimate=pl.CostEstimate(
            flops=n, transcendentals=0, bytes_accessed=2 * n * itemsize),
        **extra,
    )(x2d)


def add_one(x, *, min_pallas_bytes=1 << 20, force_pallas=False,
            donate_input=False):
    """Pallas implementation of TestModule.forward: returns x + 1."""
    orig_shape = x.shape
    dtype = x.dtype
    n = x.size
    if n == 0:
        return x
    itemsize = jnp.dtype(dtype).itemsize

    # Tiny inputs: the Pallas call is pure fixed launch/pipeline overhead; a
    # fused XLA add is strictly faster.  force_pallas=True overrides (tests).
    if not force_pallas and n * itemsize < min_pallas_bytes:
        return x + jnp.asarray(1, dtype=dtype)

    cols = _best_cols(n)
    if cols != 0:
        out2d = _tiled_add_one_2d(x.reshape(n // cols, cols),
                                  donate_input=donate_input)
        return out2d.reshape(orig_shape)

    # n is not a multiple of 128: stream the 128-aligned prefix through the
    # tiled path and finish the (<128-element) tail with a plain JAX add.
    n_aligned = (n // LANE) * LANE
    if n_aligned == 0:
        return x + jnp.asarray(1, dtype=dtype)
    flat = x.reshape(n)
    cols_h = _best_cols(n_aligned)
    head = _tiled_add_one_2d(flat[:n_aligned].reshape(n_aligned // cols_h, cols_h))
    tail = flat[n_aligned:] + jnp.asarray(1, dtype=dtype)
    return jnp.concatenate([head.reshape(n_aligned), tail]).reshape(orig_shape)


if __name__ == "__main__":
    key = jax.random.PRNGKey(0)

    # Shape implied by the module's test: (batch=2, channels=4, 16, 16).
    x = jax.random.normal(key, (2, 4, 16, 16), dtype=jnp.float32)
    y = add_one(x, force_pallas=True)   # force the Pallas path (tiny tensor)
    jax.block_until_ready(y)
    assert y.shape == x.shape and y.dtype == x.dtype
    assert jnp.allclose(y, x + 1, atol=1e-6), "mismatch vs reference (aligned path)"

    # Also exercise the non-128-multiple fallback (prefix tiled + JAX tail).
    x2 = jax.random.normal(jax.random.PRNGKey(1), (5, 77), dtype=jnp.float32)
    y2 = add_one(x2, force_pallas=True)
    jax.block_until_ready(y2)
    assert y2.shape == x2.shape and y2.dtype == x2.dtype
    assert jnp.allclose(y2, x2 + 1, atol=1e-6), "mismatch vs reference (misaligned path)"

    print("KERNEL_OK")
</pallas_src>

<mosaic_0001>
module attributes {stable_mosaic.version = 11 : i64} {
  func.func @_add_one_kernel(%arg0: i32, %arg1: memref<1x2048xf32, #tpu.memory_space<vmem>>, %arg2: memref<1x2048xf32, #tpu.memory_space<vmem>>) attributes {dimension_semantics = [#tpu.dimension_semantics<parallel>], iteration_bounds = array<i64: 1>, scalar_prefetch = 0 : i64, scratch_operands = 0 : i64, tpu.core_type = #tpu.core_type<tc>, window_params = [{transform_indices = @transform_0, window_bounds = array<i64: 1, 2048>}, {transform_indices = @transform_1, window_bounds = array<i64: 1, 2048>}]} {
    %c0 = arith.constant 0 : index
    %c0_0 = arith.constant 0 : index
    %0 = vector.load %arg1[%c0, %c0_0] : memref<1x2048xf32, #tpu.memory_space<vmem>>, vector<1x2048xf32>
    %cst = arith.constant 1.000000e+00 : f32
    %1 = vector.broadcast %cst : f32 to vector<1x2048xf32>
    %2 = arith.addf %0, %1 : vector<1x2048xf32>
    %c0_1 = arith.constant 0 : index
    %c0_2 = arith.constant 0 : index
    %3 = vector.load %arg2[%c0_1, %c0_2] : memref<1x2048xf32, #tpu.memory_space<vmem>>, vector<1x2048xf32>
    tpu.vector_store %arg2[%c0_1, %c0_2], %2 {strides = array<i32>} : memref<1x2048xf32, #tpu.memory_space<vmem>>, vector<1x2048xf32>,
    return
  }
  func.func @transform_0(%arg0: i32) -> (i32, i32) {
    %c0_i32 = arith.constant 0 : i32
    %c0_i32_0 = arith.constant 0 : i32
    return %arg0, %c0_i32 : i32, i32
  }
  func.func @transform_1(%arg0: i32) -> (i32, i32) {
    %c0_i32 = arith.constant 0 : i32
    %c0_i32_0 = arith.constant 0 : i32
    return %arg0, %c0_i32 : i32, i32
  }
}

</mosaic_0001>

<llo_original>
// kernel: tpu_custom_call.1
$region0: #{tpu_custom_call.1}
  #allocation0 [shape = 'u32[]', space=smem, size = 0x4, offset = 0x4, fixed_abs, tag = 'smem constant byte address 0x4 - core index']
  #allocation1 [shape = 'u32[72,128]{1,0:T(1,128)}', space=vmem, size = 0x9000, scoped, tag = 'internal scratch']
  %s0 = inlined_call_operand.hbm [shape: f32[1,2048], index: 0, kind: input, shape index: {}]
  %s1 = inlined_call_operand.hbm [shape: f32[1,2048], index: 1, kind: output, shape index: {}]
  %s2 = sld [smem:[#allocation0]]
  $region18: #{tpu_custom_call.1} parent=0
    _
  %s4 = ssub.s32 1, %s2
  %s5 = scalar_select 0, %s4, %s2
  $region1: #{tpu_custom_call.1} parent=0
    #allocation2 [shape = 'u8[8192]{0}', space=vmem, size = 0x2000, scoped, tag = 'input window, operand 0, single buffered']
    #allocation3 [shape = 's32[1]{0}', space=sflag, size = 0x4, scoped, tag = 'scoped memory for tpu_custom_call.1']
    #allocation4 [shape = 's32[1]{0}', space=sflag, size = 0x4, scoped, tag = 'scoped memory for tpu_custom_call.1']
    #allocation5 [shape = 'u8[8192]{0}', space=vmem, size = 0x2000, scoped, tag = 'output window, operand 0, single buffered']
    %6 = vsyncpa [#allocation3], 0
    %7 = vsyncpa [#allocation4], 0
    // Predicated region
    $region2: #{tpu_custom_call.1} parent=1 // pred_check
      _
    $region3: #{tpu_custom_call.1} parent=1 // pred_check_branch
      %9 = sbr.rel (0) target = $region5
    $region4: #{tpu_custom_call.1} parent=1 // pred_region
      %11 = vsyncadd [#allocation3], 0
      %s13 = sshll.u32 %s0, 4
      %s14 = int_to_ptr.hbm [resolvable:$true] %s13
      %s15 = sshll.u32 [#allocation2], 4
      %s16 = int_to_ptr.vmem [resolvable:$true] %s15
      %18 = dma.hbm_to_vmem [thread:$0]  %s14, 256, %s16, [#allocation3]
    $region5: #{tpu_custom_call.1} parent=1 // pred_fallthru
      _
    // Predicated region
    $region6: #{tpu_custom_call.1} parent=1 // pred_check
      _
    $region7: #{tpu_custom_call.1} parent=1 // pred_check_branch
      %20 = sbr.rel (0) target = $region9
    $region8: #{tpu_custom_call.1} parent=1 // pred_region
      %22 = dma.done [#allocation3], 256
    $region9: #{tpu_custom_call.1} parent=1 // pred_fallthru
      _
    %v23 = vld [vmem:[#allocation2] sm:$0xff]
    %v24 = vld [vmem:[#allocation2 + $0x8] sm:$0xff]
    %v25 = vadd.f32 %v23, 1.0
    %v26 = vadd.f32 %v24, 1.0
    %27 = vst [vmem:[#allocation5] sm:$0xff] %v25
    %28 = vst [vmem:[#allocation5 + $0x8] sm:$0xff] %v26
    // Predicated region
    $region10: #{tpu_custom_call.1} parent=1 // pred_check
      _
    $region11: #{tpu_custom_call.1} parent=1 // pred_check_branch
      %30 = sbr.rel (0) target = $region13
    $region12: #{tpu_custom_call.1} parent=1 // pred_region
      %32 = vsyncadd [#allocation4], 0
      %s34 = sshll.u32 [#allocation5], 4
      %s35 = int_to_ptr.vmem [resolvable:$true] %s34
      %s36 = sshll.u32 %s1, 4
      %s37 = int_to_ptr.hbm [resolvable:$true] %s36
      %39 = dma.vmem_to_hbm [thread:$0]  %s35, 256, %s37, [#allocation4]
    $region13: #{tpu_custom_call.1} parent=1 // pred_fallthru
      _
    // Predicated region
    $region14: #{tpu_custom_call.1} parent=1 // pred_check
      _
    $region15: #{tpu_custom_call.1} parent=1 // pred_check_branch
      %41 = sbr.rel (0) target = $region17
    $region16: #{tpu_custom_call.1} parent=1 // pred_region
      %43 = dma.done [#allocation4], 256
    $region17: #{tpu_custom_call.1} parent=1 // pred_fallthru
      _
    %44 = vsyncpa [#allocation3], 1
    %45 = vsyncpa [#allocation4], 1

</llo_original>
